<compile_context>
chip_gen: v6e
topology: v6e:2x2x1
jax: 0.10.0
libtpu: 0.0.40
codegen_flags: <defaults>
</compile_context>

<pallas_src>
import jax
import jax.numpy as jnp
from jax.experimental import pallas as pl
from jax.experimental.pallas import tpu as pltpu

_VPU_MIX_MAX_C = 8          # at/below this, channel mix runs as unrolled VPU MACs
_SINGLE_BUFFER_MIN_C = 128  # single-buffer resident weights only when they're big


def _silu(x):
    # Exact SiLU via tanh: x * sigmoid(x) = x * 0.5 * (1 + tanh(x/2)).
    # One EUP op per element (vs exp + reciprocal) and no inf intermediates.
    return x * (0.5 * jnp.tanh(0.5 * x) + 0.5)


def _mix_small(w, x):
    """out[b, o, t] = sum_c w[o, c] * x[b, c, t] for tiny C, on the VPU.

    w: (C, C) float32 (pre-cast in the wrapper); x: (nb, C, ts) float32.
    At C <= 8 the MXU would run far below 1% utilization, so unroll C
    broadcast multiply-adds instead.
    """
    C = w.shape[0]
    acc = w[None, :, 0:1] * x[:, 0:1, :]
    for c in range(1, C):
        acc = acc + w[None, :, c:c + 1] * x[:, c:c + 1, :]
    return acc


def resblock_kernel(x_ref, w1_ref, b1_ref, w2_ref, b2_ref, o_ref):
    # x_ref / o_ref: (nb, C, ts) tile; w*: (C, C); b*: (1, C, 1) float32.
    C = w1_ref.shape[0]
    b1 = b1_ref[...]
    b2 = b2_ref[...]

    if C <= _VPU_MIX_MAX_C:
        # VPU broadcast-MAC path (weights already f32 from the wrapper).
        x = x_ref[...].astype(jnp.float32)                    # (nb, C, ts)
        h = _silu(_mix_small(w1_ref[...], x) + b1)
        y = _silu(_mix_small(w2_ref[...], h) + b2)
        o_ref[...] = (x + y).astype(o_ref.dtype)
    else:
        # MXU path (wrapper guarantees nb == 1 here).  Operands stay in their
        # native dtype (bf16 runs the MXU single-pass); f32 accumulation.
        x = x_ref[0]                                           # (C, ts)
        h32 = _silu(jnp.dot(w1_ref[...], x,
                            preferred_element_type=jnp.float32) + b1[0])
        h = h32.astype(x.dtype)
        y32 = _silu(jnp.dot(w2_ref[...], h,
                            preferred_element_type=jnp.float32) + b2[0])
        o_ref[0] = (x.astype(jnp.float32) + y32).astype(o_ref.dtype)


def _largest_divisor_leq(n, cap):
    cap = int(max(1, min(n, cap)))
    for d in range(cap, 0, -1):
        if n % d == 0:
            return d
    return 1


def resblock_forward(x_nchw, w1, b1, w2, b2, *, act_tile_bytes=None):
    """ResBlock forward.  x_nchw: (N, C, H, W); w1/w2: (C, C, 1, 1); b1/b2: (C,)."""
    N, C, H, W = x_nchw.shape
    S = H * W
    itemsize = jnp.dtype(x_nchw.dtype).itemsize
    c_pad = -(-C // 8) * 8                  # sublane-padded channels (VMEM layout)

    # Free reshape: NCHW is already contiguous as (N, C, S); no transpose.
    x3 = x_nchw.reshape(N, C, S)

    small_c = C <= _VPU_MIX_MAX_C
    mix_dtype = jnp.float32 if small_c else x_nchw.dtype
    w1_m = w1[:, :, 0, 0].astype(mix_dtype)     # cast once here, not per grid step
    w2_m = w2[:, :, 0, 0].astype(mix_dtype)
    b1_m = b1.reshape(1, C, 1).astype(jnp.float32)
    b2_m = b2.reshape(1, C, 1).astype(jnp.float32)

    # ---- tile selection from a VMEM byte budget ---------------------------
    try:
        physical_vmem = int(pltpu.get_tpu_info().vmem_capacity_bytes)
    except Exception:
        physical_vmem = 64 * 1024 * 1024        # conservative (v7x per-core)
    if act_tile_bytes is None:
        # ~2 MiB/buffer on v7x (64 MiB VMEM), ~4 MiB on v5e/v6e (128 MiB).
        act_tile_bytes = min(8 << 20, max(1 << 20, physical_vmem // 32))

    ts_cap = max(128, (act_tile_bytes // (c_pad * itemsize)) // 128 * 128)
    if S <= ts_cap:
        ts = S                                   # full-extent block: always legal
        nb = 1
        if small_c:
            # Fold several images per step when they are small, so each grid
            # step moves enough bytes to amortize the ~0.35us step overhead.
            nb = _largest_divisor_leq(N, act_tile_bytes // (c_pad * S * itemsize))
    else:
        ts = ts_cap                              # lane-dense multiple of 128
        nb = 1

    grid_n = N // nb
    grid_s = int(pl.cdiv(S, ts))                 # partial last tile masked by Pallas
    # Megacore (v7x): keep >= 2 grid steps whenever the problem can be split.
    if grid_n * grid_s == 1:
        if N >= 2:
            nb = _largest_divisor_leq(N, N // 2)
            grid_n = N // nb
        elif S >= 256:
            ts = ((S + 1) // 2 + 127) // 128 * 128
            grid_s = int(pl.cdiv(S, ts))
    grid = (grid_n, grid_s)

    # ---- VMEM limit: cap at 75% of physical (48 MiB v7x / 96 MiB v5e,v6e) --
    act_buf = nb * c_pad * ts * itemsize
    w_buf = c_pad * (-(-C // 128) * 128) * jnp.dtype(mix_dtype).itemsize
    n_w_bufs = 1 if C >= _SINGLE_BUFFER_MIN_C else 2
    need = 4 * act_buf                           # double-buffered x in + out
    need += 2 * n_w_bufs * w_buf + 4 * 8 * 128 * 4
    need += 4 * nb * c_pad * ts * 4              # f32 temporaries inside the body
    vmem_limit = int(min(physical_vmem * 3 // 4,
                         max(32 * 1024 * 1024, need * 3 // 2)))

    # Grid-invariant weights: single-buffer when the extra buffer matters
    # (2*C^2*itemsize each); tiny weights keep the default double buffer.
    w_kwargs = dict(pipeline_mode=pl.Buffered(1)) if C >= _SINGLE_BUFFER_MIN_C else {}

    cost = pl.CostEstimate(
        flops=4 * N * S * C * C,                 # two (C,C)x(C,S) mixes, 2 flop/MAC
        transcendentals=2 * N * S * C,           # one tanh per SiLU per element
        bytes_accessed=(2 * N * C * S + 2 * C * C + 2 * C) * itemsize,
    )

    out3 = pl.pallas_call(
        resblock_kernel,
        out_shape=jax.ShapeDtypeStruct((N, C, S), x_nchw.dtype),
        grid_spec=pltpu.PrefetchScalarGridSpec(
            num_scalar_prefetch=0,
            grid=grid,
            in_specs=[
                pl.BlockSpec((nb, C, ts), lambda n, s: (n, 0, s)),       # x tile
                pl.BlockSpec((C, C), lambda n, s: (0, 0), **w_kwargs),   # W1 (resident)
                pl.BlockSpec((1, C, 1), lambda n, s: (0, 0, 0)),         # b1
                pl.BlockSpec((C, C), lambda n, s: (0, 0), **w_kwargs),   # W2 (resident)
                pl.BlockSpec((1, C, 1), lambda n, s: (0, 0, 0)),         # b2
            ],
            out_specs=pl.BlockSpec((nb, C, ts), lambda n, s: (n, 0, s)),
        ),
        compiler_params=pltpu.CompilerParams(
            dimension_semantics=("parallel", "parallel"),
            vmem_limit_bytes=vmem_limit,
        ),
        cost_estimate=cost,
    )(x3, w1_m, b1_m, w2_m, b2_m)

    return out3.reshape(N, C, H, W)              # free reshape back to NCHW


def resblock_reference(x_nchw, w1, b1, w2, b2):
    """Pure-JAX reference matching PyTorch semantics (batchnorm=False)."""
    x = x_nchw.astype(jnp.float32)
    W1 = w1[:, :, 0, 0]
    W2 = w2[:, :, 0, 0]
    h = jnp.einsum("oc,nchw->nohw", W1, x) + b1[None, :, None, None]
    h = h * jax.nn.sigmoid(h)
    y = jnp.einsum("oc,nchw->nohw", W2, h) + b2[None, :, None, None]
    y = y * jax.nn.sigmoid(y)
    return (x + y).astype(x_nchw.dtype)


if __name__ == "__main__":
    key = jax.random.PRNGKey(0)
    k_x, k_w1, k_b1, k_w2, k_b2 = jax.random.split(key, 5)

    N, C, H, W = 2, 4, 16, 16
    x = jax.random.normal(k_x, (N, C, H, W), dtype=jnp.float32)

    # Deterministic Conv2d-style init; shapes from nn.Conv2d(C, C, kernel_size=1):
    # weight (C, C, 1, 1), bias (C,)
    fan_in = C * 1 * 1
    bound = 1.0 / (fan_in ** 0.5)
    w1 = jax.random.uniform(k_w1, (C, C, 1, 1), minval=-bound, maxval=bound, dtype=jnp.float32)
    b1 = jax.random.uniform(k_b1, (C,), minval=-bound, maxval=bound, dtype=jnp.float32)
    w2 = jax.random.uniform(k_w2, (C, C, 1, 1), minval=-bound, maxval=bound, dtype=jnp.float32)
    b2 = jax.random.uniform(k_b2, (C,), minval=-bound, maxval=bound, dtype=jnp.float32)

    out = resblock_forward(x, w1, b1, w2, b2)
    out = jax.block_until_ready(out)

    ref = resblock_reference(x, w1, b1, w2, b2)
    assert out.shape == (N, C, H, W)
    # Tight tolerance again: SiLU now uses the exact tanh formulation (no
    # approximate reciprocal), so only transcendental/accumulation-order noise.
    err = float(jnp.max(jnp.abs(out - ref)))
    assert jnp.allclose(out, ref, atol=1e-4, rtol=1e-4), err

    print("KERNEL_OK")
</pallas_src>

<mosaic_0001>
module attributes {stable_mosaic.version = 11 : i64} {
  func.func @resblock_kernel(%arg0: i32, %arg1: i32, %arg2: memref<1x4x256xf32, #tpu.memory_space<vmem>>, %arg3: memref<4x4xf32, #tpu.memory_space<vmem>>, %arg4: memref<1x4x1xf32, #tpu.memory_space<vmem>>, %arg5: memref<4x4xf32, #tpu.memory_space<vmem>>, %arg6: memref<1x4x1xf32, #tpu.memory_space<vmem>>, %arg7: memref<1x4x256xf32, #tpu.memory_space<vmem>>) attributes {dimension_semantics = [#tpu.dimension_semantics<parallel>, #tpu.dimension_semantics<parallel>], iteration_bounds = array<i64: 2, 1>, scalar_prefetch = 0 : i64, scratch_operands = 0 : i64, tpu.core_type = #tpu.core_type<tc>, window_params = [{transform_indices = @transform_0, window_bounds = array<i64: 1, 4, 256>}, {pipeline_mode = #tpu.pipeline_mode<synchronous>, transform_indices = @transform_1, window_bounds = array<i64: 4, 4>}, {pipeline_mode = #tpu.pipeline_mode<synchronous>, transform_indices = @transform_2, window_bounds = array<i64: 1, 4, 1>}, {pipeline_mode = #tpu.pipeline_mode<synchronous>, transform_indices = @transform_3, window_bounds = array<i64: 4, 4>}, {pipeline_mode = #tpu.pipeline_mode<synchronous>, transform_indices = @transform_4, window_bounds = array<i64: 1, 4, 1>}, {transform_indices = @transform_5, window_bounds = array<i64: 1, 4, 256>}]} {
    %c0 = arith.constant 0 : index
    %c0_0 = arith.constant 0 : index
    %c0_1 = arith.constant 0 : index
    %0 = vector.load %arg4[%c0, %c0_0, %c0_1] : memref<1x4x1xf32, #tpu.memory_space<vmem>>, vector<1x4x1xf32>
    %c0_2 = arith.constant 0 : index
    %c0_3 = arith.constant 0 : index
    %c0_4 = arith.constant 0 : index
    %1 = vector.load %arg6[%c0_2, %c0_3, %c0_4] : memref<1x4x1xf32, #tpu.memory_space<vmem>>, vector<1x4x1xf32>
    %c0_5 = arith.constant 0 : index
    %c0_6 = arith.constant 0 : index
    %c0_7 = arith.constant 0 : index
    %2 = vector.load %arg2[%c0_5, %c0_6, %c0_7] : memref<1x4x256xf32, #tpu.memory_space<vmem>>, vector<1x4x256xf32>
    %c0_8 = arith.constant 0 : index
    %c0_9 = arith.constant 0 : index
    %3 = vector.load %arg3[%c0_8, %c0_9] : memref<4x4xf32, #tpu.memory_space<vmem>>, vector<4x4xf32>
    %4 = vector.extract_strided_slice %3 {offsets = [0, 0], sizes = [4, 1], strides = [1, 1]} : vector<4x4xf32> to vector<4x1xf32>
    %5 = vector.shape_cast %4 : vector<4x1xf32> to vector<1x4x1xf32>
    %6 = vector.extract_strided_slice %2 {offsets = [0, 0, 0], sizes = [1, 1, 256], strides = [1, 1, 1]} : vector<1x4x256xf32> to vector<1x1x256xf32>
    %7 = vector.broadcast %5 : vector<1x4x1xf32> to vector<1x4x256xf32>
    %8 = vector.broadcast %6 : vector<1x1x256xf32> to vector<1x4x256xf32>
    %9 = arith.mulf %7, %8 : vector<1x4x256xf32>
    %10 = vector.extract_strided_slice %3 {offsets = [0, 1], sizes = [4, 1], strides = [1, 1]} : vector<4x4xf32> to vector<4x1xf32>
    %11 = vector.shape_cast %10 : vector<4x1xf32> to vector<1x4x1xf32>
    %12 = vector.extract_strided_slice %2 {offsets = [0, 1, 0], sizes = [1, 1, 256], strides = [1, 1, 1]} : vector<1x4x256xf32> to vector<1x1x256xf32>
    %13 = vector.broadcast %11 : vector<1x4x1xf32> to vector<1x4x256xf32>
    %14 = vector.broadcast %12 : vector<1x1x256xf32> to vector<1x4x256xf32>
    %15 = arith.mulf %13, %14 : vector<1x4x256xf32>
    %16 = arith.addf %9, %15 : vector<1x4x256xf32>
    %17 = vector.extract_strided_slice %3 {offsets = [0, 2], sizes = [4, 1], strides = [1, 1]} : vector<4x4xf32> to vector<4x1xf32>
    %18 = vector.shape_cast %17 : vector<4x1xf32> to vector<1x4x1xf32>
    %19 = vector.extract_strided_slice %2 {offsets = [0, 2, 0], sizes = [1, 1, 256], strides = [1, 1, 1]} : vector<1x4x256xf32> to vector<1x1x256xf32>
    %20 = vector.broadcast %18 : vector<1x4x1xf32> to vector<1x4x256xf32>
    %21 = vector.broadcast %19 : vector<1x1x256xf32> to vector<1x4x256xf32>
    %22 = arith.mulf %20, %21 : vector<1x4x256xf32>
    %23 = arith.addf %16, %22 : vector<1x4x256xf32>
    %24 = vector.extract_strided_slice %3 {offsets = [0, 3], sizes = [4, 1], strides = [1, 1]} : vector<4x4xf32> to vector<4x1xf32>
    %25 = vector.shape_cast %24 : vector<4x1xf32> to vector<1x4x1xf32>
    %26 = vector.extract_strided_slice %2 {offsets = [0, 3, 0], sizes = [1, 1, 256], strides = [1, 1, 1]} : vector<1x4x256xf32> to vector<1x1x256xf32>
    %27 = vector.broadcast %25 : vector<1x4x1xf32> to vector<1x4x256xf32>
    %28 = vector.broadcast %26 : vector<1x1x256xf32> to vector<1x4x256xf32>
    %29 = arith.mulf %27, %28 : vector<1x4x256xf32>
    %30 = arith.addf %23, %29 : vector<1x4x256xf32>
    %31 = vector.broadcast %0 : vector<1x4x1xf32> to vector<1x4x256xf32>
    %32 = arith.addf %30, %31 : vector<1x4x256xf32>
    %cst = arith.constant 5.000000e-01 : f32
    %33 = vector.broadcast %cst : f32 to vector<1x4x256xf32>
    %34 = arith.mulf %33, %32 : vector<1x4x256xf32>
    %35 = math.tanh %34 : vector<1x4x256xf32>
    %cst_10 = arith.constant 5.000000e-01 : f32
    %36 = vector.broadcast %cst_10 : f32 to vector<1x4x256xf32>
    %37 = arith.mulf %36, %35 : vector<1x4x256xf32>
    %cst_11 = arith.constant 5.000000e-01 : f32
    %38 = vector.broadcast %cst_11 : f32 to vector<1x4x256xf32>
    %39 = arith.addf %37, %38 : vector<1x4x256xf32>
    %40 = arith.mulf %32, %39 : vector<1x4x256xf32>
    %c0_12 = arith.constant 0 : index
    %c0_13 = arith.constant 0 : index
    %41 = vector.load %arg5[%c0_12, %c0_13] : memref<4x4xf32, #tpu.memory_space<vmem>>, vector<4x4xf32>
    %42 = vector.extract_strided_slice %41 {offsets = [0, 0], sizes = [4, 1], strides = [1, 1]} : vector<4x4xf32> to vector<4x1xf32>
    %43 = vector.shape_cast %42 : vector<4x1xf32> to vector<1x4x1xf32>
    %44 = vector.extract_strided_slice %40 {offsets = [0, 0, 0], sizes = [1, 1, 256], strides = [1, 1, 1]} : vector<1x4x256xf32> to vector<1x1x256xf32>
    %45 = vector.broadcast %43 : vector<1x4x1xf32> to vector<1x4x256xf32>
    %46 = vector.broadcast %44 : vector<1x1x256xf32> to vector<1x4x256xf32>
    %47 = arith.mulf %45, %46 : vector<1x4x256xf32>
    %48 = vector.extract_strided_slice %41 {offsets = [0, 1], sizes = [4, 1], strides = [1, 1]} : vector<4x4xf32> to vector<4x1xf32>
    %49 = vector.shape_cast %48 : vector<4x1xf32> to vector<1x4x1xf32>
    %50 = vector.extract_strided_slice %40 {offsets = [0, 1, 0], sizes = [1, 1, 256], strides = [1, 1, 1]} : vector<1x4x256xf32> to vector<1x1x256xf32>
    %51 = vector.broadcast %49 : vector<1x4x1xf32> to vector<1x4x256xf32>
    %52 = vector.broadcast %50 : vector<1x1x256xf32> to vector<1x4x256xf32>
    %53 = arith.mulf %51, %52 : vector<1x4x256xf32>
    %54 = arith.addf %47, %53 : vector<1x4x256xf32>
    %55 = vector.extract_strided_slice %41 {offsets = [0, 2], sizes = [4, 1], strides = [1, 1]} : vector<4x4xf32> to vector<4x1xf32>
    %56 = vector.shape_cast %55 : vector<4x1xf32> to vector<1x4x1xf32>
    %57 = vector.extract_strided_slice %40 {offsets = [0, 2, 0], sizes = [1, 1, 256], strides = [1, 1, 1]} : vector<1x4x256xf32> to vector<1x1x256xf32>
    %58 = vector.broadcast %56 : vector<1x4x1xf32> to vector<1x4x256xf32>
    %59 = vector.broadcast %57 : vector<1x1x256xf32> to vector<1x4x256xf32>
    %60 = arith.mulf %58, %59 : vector<1x4x256xf32>
    %61 = arith.addf %54, %60 : vector<1x4x256xf32>
    %62 = vector.extract_strided_slice %41 {offsets = [0, 3], sizes = [4, 1], strides = [1, 1]} : vector<4x4xf32> to vector<4x1xf32>
    %63 = vector.shape_cast %62 : vector<4x1xf32> to vector<1x4x1xf32>
    %64 = vector.extract_strided_slice %40 {offsets = [0, 3, 0], sizes = [1, 1, 256], strides = [1, 1, 1]} : vector<1x4x256xf32> to vector<1x1x256xf32>
    %65 = vector.broadcast %63 : vector<1x4x1xf32> to vector<1x4x256xf32>
    %66 = vector.broadcast %64 : vector<1x1x256xf32> to vector<1x4x256xf32>
    %67 = arith.mulf %65, %66 : vector<1x4x256xf32>
    %68 = arith.addf %61, %67 : vector<1x4x256xf32>
    %69 = vector.broadcast %1 : vector<1x4x1xf32> to vector<1x4x256xf32>
    %70 = arith.addf %68, %69 : vector<1x4x256xf32>
    %cst_14 = arith.constant 5.000000e-01 : f32
    %71 = vector.broadcast %cst_14 : f32 to vector<1x4x256xf32>
    %72 = arith.mulf %71, %70 : vector<1x4x256xf32>
    %73 = math.tanh %72 : vector<1x4x256xf32>
    %cst_15 = arith.constant 5.000000e-01 : f32
    %74 = vector.broadcast %cst_15 : f32 to vector<1x4x256xf32>
    %75 = arith.mulf %74, %73 : vector<1x4x256xf32>
    %cst_16 = arith.constant 5.000000e-01 : f32
    %76 = vector.broadcast %cst_16 : f32 to vector<1x4x256xf32>
    %77 = arith.addf %75, %76 : vector<1x4x256xf32>
    %78 = arith.mulf %70, %77 : vector<1x4x256xf32>
    %79 = arith.addf %2, %78 : vector<1x4x256xf32>
    %c0_17 = arith.constant 0 : index
    %c0_18 = arith.constant 0 : index
    %c0_19 = arith.constant 0 : index
    %80 = vector.load %arg7[%c0_17, %c0_18, %c0_19] : memref<1x4x256xf32, #tpu.memory_space<vmem>>, vector<1x4x256xf32>
    tpu.vector_store %arg7[%c0_17, %c0_18, %c0_19], %79 {strides = array<i32>} : memref<1x4x256xf32, #tpu.memory_space<vmem>>, vector<1x4x256xf32>,
    return
  }
  func.func @transform_0(%arg0: i32, %arg1: i32) -> (i32, i32, i32) {
    %c0_i32 = arith.constant 0 : i32
    %c0_i32_0 = arith.constant 0 : i32
    return %arg0, %c0_i32, %arg1 : i32, i32, i32
  }
  func.func @transform_1(%arg0: i32, %arg1: i32) -> (i32, i32) {
    %c0_i32 = arith.constant 0 : i32
    %c0_i32_0 = arith.constant 0 : i32
    %c0_i32_1 = arith.constant 0 : i32
    return %c0_i32, %c0_i32_0 : i32, i32
  }
  func.func @transform_2(%arg0: i32, %arg1: i32) -> (i32, i32, i32) {
    %c0_i32 = arith.constant 0 : i32
    %c0_i32_0 = arith.constant 0 : i32
    %c0_i32_1 = arith.constant 0 : i32
    %c0_i32_2 = arith.constant 0 : i32
    return %c0_i32, %c0_i32_0, %c0_i32_1 : i32, i32, i32
  }
  func.func @transform_3(%arg0: i32, %arg1: i32) -> (i32, i32) {
    %c0_i32 = arith.constant 0 : i32
    %c0_i32_0 = arith.constant 0 : i32
    %c0_i32_1 = arith.constant 0 : i32
    return %c0_i32, %c0_i32_0 : i32, i32
  }
  func.func @transform_4(%arg0: i32, %arg1: i32) -> (i32, i32, i32) {
    %c0_i32 = arith.constant 0 : i32
    %c0_i32_0 = arith.constant 0 : i32
    %c0_i32_1 = arith.constant 0 : i32
    %c0_i32_2 = arith.constant 0 : i32
    return %c0_i32, %c0_i32_0, %c0_i32_1 : i32, i32, i32
  }
  func.func @transform_5(%arg0: i32, %arg1: i32) -> (i32, i32, i32) {
    %c0_i32 = arith.constant 0 : i32
    %c0_i32_0 = arith.constant 0 : i32
    return %arg0, %c0_i32, %arg1 : i32, i32, i32
  }
}

</mosaic_0001>

<llo_original>
// kernel: tpu_custom_call.1
$region0: #{tpu_custom_call.1}
  #allocation0 [shape = 'u32[]', space=smem, size = 0x4, offset = 0x4, fixed_abs, tag = 'smem constant byte address 0x4 - core index']
  #allocation1 [shape = 'u32[144,128]{1,0:T(1,128)}', space=vmem, size = 0x12000, scoped, tag = 'internal scratch']
  %s0 = inlined_call_operand.hbm [shape: f32[2,4,256], index: 0, kind: input, shape index: {}]
  %s1 = inlined_call_operand.vmem [shape: f32[4,4], index: 1, kind: input, shape index: {}]
  %s2 = inlined_call_operand.vmem [shape: f32[1,4,1], index: 2, kind: input, shape index: {}]
  %s3 = inlined_call_operand.vmem [shape: f32[4,4], index: 3, kind: input, shape index: {}]
  %s4 = inlined_call_operand.vmem [shape: f32[1,4,1], index: 4, kind: input, shape index: {}]
  %s5 = inlined_call_operand.hbm [shape: f32[2,4,256], index: 5, kind: output, shape index: {}]
  %s6 = sld [smem:[#allocation0]]
  $region57: #{tpu_custom_call.1} parent=0
    _
  %s8 = ssub.s32 1, %s6
  %s9 = scalar_select 0, %s8, %s6
  $region1: #{tpu_custom_call.1} parent=0
    #allocation2 [shape = 'u8[8192]{0}', space=vmem, size = 0x2000, scoped, tag = 'input window, operand 0']
    #allocation3 [shape = 's32[2]{0}', space=sflag, size = 0x8, scoped, tag = 'scoped memory for tpu_custom_call.1']
    #allocation4 [shape = 's32[2]{0}', space=sflag, size = 0x8, scoped, tag = 'scoped memory for tpu_custom_call.1']
    #allocation5 [shape = 'u8[8192]{0}', space=vmem, size = 0x2000, scoped, tag = 'output window, operand 0']
    %10 = vsyncpa [#allocation3], 0
    %s11 = scalar_lea.sflag [#allocation3], 1
    %12 = vsyncpa %s11, 0
    %13 = vsyncpa [#allocation4], 0
    %s14 = scalar_lea.sflag [#allocation4], 1
    %15 = vsyncpa %s14, 0
    loop: start=0, step=1, limit=4
    $region2: #{tpu_custom_call.1} parent=1 // loop_pre_header
      _
    $region3: #{tpu_custom_call.1} parent=1 // loop_header
      %s17 = sphi 0, %s21
      %p18 = scmp.ge.s32.totalorder %s17, 4
      %s24 = sphi 0, %s36
      %s25 = sphi 0, %s32
      %s26 = sphi 0, %s24
      %s27 = sphi 0, %s25
      %s28 = sphi 0, %s26
      %s29 = sphi 0, %s27
      %s41 = sphi 0, %s43
      %s44 = sphi 0, %s41
      %s45 = sphi 0, %s44
      %s61 = sphi 0, %s45
      %s65 = sphi 0, %s65
      %s67 = sphi 0, %s65
      %s68 = sphi 0, %s67
      %s82 = sphi 0, %s68
      %s86 = sphi 0, %s86
      %s88 = sphi 0, %s86
      %s89 = sphi 0, %s88
      %s103 = sphi 0, %s89
      %s107 = sphi 0, %s107
      %s109 = sphi 0, %s107
      %s110 = sphi 0, %s109
      %s124 = sphi 0, %s110
      %s128 = sphi 0, %s128
      %s130 = sphi 0, %s128
      %s131 = sphi 0, %s130
      %s145 = sphi 0, %s131
      %s153 = sphi 0, %s155
      %s156 = sphi 0, %s153
      %s157 = sphi 0, %s156
      %s173 = sphi 0, %s157
    $region4: #{tpu_custom_call.1} parent=1 // loop_header_branch
      %20 = sbr.rel (%p18) target = $region8
    $region5: #{tpu_custom_call.1} parent=1 // loop_body
      %s22 = ssub.s32 %s17, 1
      %s23 = ssub.s32 %s17, 2
      %s30 = sadd.s32 1, %s25
      %p31 = scmp.ge.s32.totalorder %s30, 1
      %s32 = scalar_select %p31, 0, %s30
      %s33 = sadd.s32 1, %s24
      %s34 = scalar_select %p31, %s33, %s24
      %p35 = scmp.ge.s32.totalorder %s34, 2
      %s36 = scalar_select %p35, 0, %s34
      %s37 = ssub.s32 %s24, %s36
      %s38 = ssub.s32 %s25, %s32
      %s39 = sor.u32 %s37, %s38
      %p40 = scmp.eq.s32.totalorder %s39, 0
      %s42 = sadd.s32 %s41, 1
      %s43 = scalar_select %p40, %s41, %s42
      %p46 = pneg %p40
      %p47 = scmp.eq.s32.totalorder %s17, 1
      %p48 = por %p46, %p47
      %p49 = scmp.ne.s32.totalorder %s41, %s44
      %p50 = scmp.eq.s32.totalorder %s17, 0
      %p51 = por %p49, %p50
      %p52 = scmp.ne.s32.totalorder %s41, %s44
      %p53 = scmp.eq.s32.totalorder %s22, 1
      %p54 = por %p52, %p53
      %p55 = scmp.ne.s32.totalorder %s44, %s45
      %p56 = scmp.eq.s32.totalorder %s22, 0
      %p57 = por %p55, %p56
      %p58 = scmp.ne.s32.totalorder %s44, %s45
      %p59 = scmp.eq.s32.totalorder %s23, 1
      %p60 = por %p58, %p59
      %p62 = scmp.ne.s32.totalorder %s45, %s61
      %p63 = scmp.eq.s32.totalorder %s23, 0
      %p64 = por %p62, %p63
      %s66 = sadd.s32 %s65, 1
      %p69 = scmp.eq.s32.totalorder %s17, 1
      %p70 = scmp.ne.s32.totalorder %s65, %s67
      %p71 = scmp.eq.s32.totalorder %s17, 0
      %p72 = por %p70, %p71
      %p73 = scmp.ne.s32.totalorder %s65, %s67
      %p74 = scmp.eq.s32.totalorder %s22, 1
      %p75 = por %p73, %p74
      %p76 = scmp.ne.s32.totalorder %s67, %s68
      %p77 = scmp.eq.s32.totalorder %s22, 0
      %p78 = por %p76, %p77
      %p79 = scmp.ne.s32.totalorder %s67, %s68
      %p80 = scmp.eq.s32.totalorder %s23, 1
      %p81 = por %p79, %p80
      %p83 = scmp.ne.s32.totalorder %s68, %s82
      %p84 = scmp.eq.s32.totalorder %s23, 0
      %p85 = por %p83, %p84
      %s87 = sadd.s32 %s86, 1
      %p90 = scmp.eq.s32.totalorder %s17, 1
      %p91 = scmp.ne.s32.totalorder %s86, %s88
      %p92 = scmp.eq.s32.totalorder %s17, 0
      %p93 = por %p91, %p92
      %p94 = scmp.ne.s32.totalorder %s86, %s88
      %p95 = scmp.eq.s32.totalorder %s22, 1
      %p96 = por %p94, %p95
      %p97 = scmp.ne.s32.totalorder %s88, %s89
      %p98 = scmp.eq.s32.totalorder %s22, 0
      %p99 = por %p97, %p98
      %p100 = scmp.ne.s32.totalorder %s88, %s89
      %p101 = scmp.eq.s32.totalorder %s23, 1
      %p102 = por %p100, %p101
      %p104 = scmp.ne.s32.totalorder %s89, %s103
      %p105 = scmp.eq.s32.totalorder %s23, 0
      %p106 = por %p104, %p105
      %s108 = sadd.s32 %s107, 1
      %p111 = scmp.eq.s32.totalorder %s17, 1
      %p112 = scmp.ne.s32.totalorder %s107, %s109
      %p113 = scmp.eq.s32.totalorder %s17, 0
      %p114 = por %p112, %p113
      %p115 = scmp.ne.s32.totalorder %s107, %s109
      %p116 = scmp.eq.s32.totalorder %s22, 1
      %p117 = por %p115, %p116
      %p118 = scmp.ne.s32.totalorder %s109, %s110
      %p119 = scmp.eq.s32.totalorder %s22, 0
      %p120 = por %p118, %p119
      %p121 = scmp.ne.s32.totalorder %s109, %s110
      %p122 = scmp.eq.s32.totalorder %s23, 1
      %p123 = por %p121, %p122
      %p125 = scmp.ne.s32.totalorder %s110, %s124
      %p126 = scmp.eq.s32.totalorder %s23, 0
      %p127 = por %p125, %p126
      %s129 = sadd.s32 %s128, 1
      %p132 = scmp.eq.s32.totalorder %s17, 1
      %p133 = scmp.ne.s32.totalorder %s128, %s130
      %p134 = scmp.eq.s32.totalorder %s17, 0
      %p135 = por %p133, %p134
      %p136 = scmp.ne.s32.totalorder %s128, %s130
      %p137 = scmp.eq.s32.totalorder %s22, 1
      %p138 = por %p136, %p137
      %p139 = scmp.ne.s32.totalorder %s130, %s131
      %p140 = scmp.eq.s32.totalorder %s22, 0
      %p141 = por %p139, %p140
      %p142 = scmp.ne.s32.totalorder %s130, %s131
      %p143 = scmp.eq.s32.totalorder %s23, 1
      %p144 = por %p142, %p143
      %p146 = scmp.ne.s32.totalorder %s131, %s145
      %p147 = scmp.eq.s32.totalorder %s23, 0
      %p148 = por %p146, %p147
      %s149 = ssub.s32 %s24, %s36
      %s150 = ssub.s32 %s25, %s32
      %s151 = sor.u32 %s149, %s150
      %p152 = scmp.eq.s32.totalorder %s151, 0
      %s154 = sadd.s32 %s153, 1
      %s155 = scalar_select %p152, %s153, %s154
      %p158 = pneg %p152
      %p159 = scmp.eq.s32.totalorder %s17, 1
      %p160 = por %p158, %p159
      %p161 = scmp.ne.s32.totalorder %s153, %s156
      %p162 = scmp.eq.s32.totalorder %s17, 0
      %p163 = por %p161, %p162
      %p164 = scmp.ne.s32.totalorder %s153, %s156
      %p165 = scmp.eq.s32.totalorder %s22, 1
      %p166 = por %p164, %p165
      %p167 = scmp.ne.s32.totalorder %s156, %s157
      %p168 = scmp.eq.s32.totalorder %s22, 0
      %p169 = por %p167, %p168
      %p170 = scmp.ne.s32.totalorder %s156, %s157
      %p171 = scmp.eq.s32.totalorder %s23, 1
      %p172 = por %p170, %p171
      %p174 = scmp.ne.s32.totalorder %s157, %s173
      %p175 = scmp.eq.s32.totalorder %s23, 0
      %p176 = por %p174, %p175
      %p177 = scmp.le.s32.totalorder 1, %s17
      %p178 = scmp.lt.s32.totalorder %s17, 3
      %p179 = pnand %p177, %p178
      %p180 = pneg %p179
      // Predicated region
      $region9: #{tpu_custom_call.1} parent=5 // pred_check
        _
      $region10: #{tpu_custom_call.1} parent=5 // pred_check_branch
        %182 = sbr.rel (%p179) target = $region12
      $region11: #{tpu_custom_call.1} parent=5 // pred_region
        %s183 = ssub.s32 %s17, 1
        // Predicated region
        $region13: #{tpu_custom_call.1} parent=11 // pred_check
          %p184 = pneg %p78
        $region14: #{tpu_custom_call.1} parent=11 // pred_check_branch
          %186 = sbr.rel (%p184) target = $region16
        $region15: #{tpu_custom_call.1} parent=11 // pred_region
          _
        $region16: #{tpu_custom_call.1} parent=11 // pred_fallthru
          _
        // Predicated region
        $region17: #{tpu_custom_call.1} parent=11 // pred_check
          %p187 = pneg %p99
        $region18: #{tpu_custom_call.1} parent=11 // pred_check_branch
          %189 = sbr.rel (%p187) target = $region20
        $region19: #{tpu_custom_call.1} parent=11 // pred_region
          _
        $region20: #{tpu_custom_call.1} parent=11 // pred_fallthru
          _
        // Predicated region
        $region21: #{tpu_custom_call.1} parent=11 // pred_check
          %p190 = pneg %p120
        $region22: #{tpu_custom_call.1} parent=11 // pred_check_branch
          %192 = sbr.rel (%p190) target = $region24
        $region23: #{tpu_custom_call.1} parent=11 // pred_region
          _
        $region24: #{tpu_custom_call.1} parent=11 // pred_fallthru
          _
        // Predicated region
        $region25: #{tpu_custom_call.1} parent=11 // pred_check
          %p193 = pneg %p141
        $region26: #{tpu_custom_call.1} parent=11 // pred_check_branch
          %195 = sbr.rel (%p193) target = $region28
        $region27: #{tpu_custom_call.1} parent=11 // pred_region
          _
        $region28: #{tpu_custom_call.1} parent=11 // pred_fallthru
          _
      $region12: #{tpu_custom_call.1} parent=5 // pred_fallthru
        _
      %p196 = scmp.lt.s32.totalorder %s17, 2
      // Predicated region
      $region29: #{tpu_custom_call.1} parent=5 // pred_check
        %p197 = pneg %p196
      $region30: #{tpu_custom_call.1} parent=5 // pred_check_branch
        %199 = sbr.rel (%p197) target = $region32
      $region31: #{tpu_custom_call.1} parent=5 // pred_region
        // Predicated region
        $region33: #{tpu_custom_call.1} parent=31 // pred_check
          %p200 = pneg %p51
        $region34: #{tpu_custom_call.1} parent=31 // pred_check_branch
          %202 = sbr.rel (%p200) target = $region36
        $region35: #{tpu_custom_call.1} parent=31 // pred_region
          %s203 = sand.u32 %s41, 1
          %s204 = scalar_lea.sflag [#allocation3], %s203
          %s205 = sand.u32 %s41, 1
          %s206 = smul.addr %s205, 8
          %s207 = scalar_lea.vmem [#allocation2], %s206
          %s208 = smul.u32 2, %s25
          %s210 = ssub.s32 128, 128
          %211 = vsyncadd %s204, %s210
          %s212 = smul.addr %s24, 2
          %s213 = sadd.s32 %s208, %s212
          %s214 = smul.addr %s213, 64
          %s215 = scalar_lea.hbm %s0, %s214
          %s217 = sshll.u32 %s207, 4
          %s218 = int_to_ptr.vmem [resolvable:$true] %s217
          %220 = dma.hbm_to_vmem [thread:$0]  %s215, 128, %s218, %s204
        $region36: #{tpu_custom_call.1} parent=31 // pred_fallthru
          _
      $region32: #{tpu_custom_call.1} parent=5 // pred_fallthru
        _
      %p221 = scmp.le.s32.totalorder 1, %s17
      %p222 = scmp.lt.s32.totalorder %s17, 3
      %p223 = pnand %p221, %p222
      %p224 = pneg %p223
      // Predicated region
      $region37: #{tpu_custom_call.1} parent=5 // pred_check
        _
      $region38: #{tpu_custom_call.1} parent=5 // pred_check_branch
        %226 = sbr.rel (%p223) target = $region40
      $region39: #{tpu_custom_call.1} parent=5 // pred_region
        %s227 = ssub.s32 %s17, 1
        %s228 = sand.u32 %s44, 1
        %s229 = scalar_lea.sflag [#allocation3], %s228
        %s230 = sand.u32 %s44, 1
        %s231 = smul.addr %s230, 8
        %s232 = scalar_lea.vmem [#allocation2], %s231
        // Predicated region
        $region41: #{tpu_custom_call.1} parent=39 // pred_check
          %p233 = pneg %p57
        $region42: #{tpu_custom_call.1} parent=39 // pred_check_branch
          %235 = sbr.rel (%p233) target = $region44
        $region43: #{tpu_custom_call.1} parent=39 // pred_region
          %236 = dma.done %s229, 128
        $region44: #{tpu_custom_call.1} parent=39 // pred_fallthru
          _
        %s237 = sand.u32 %s44, 1
        %s238 = scalar_lea.sflag [#allocation3], %s237
        %s239 = sand.u32 %s44, 1
        %s240 = smul.addr %s239, 8
        %s241 = scalar_lea.vmem [#allocation2], %s240
        %p242 = pneg %p57
        %p243 = pneg %p54
        %p244 = pneg %p78
        %p245 = pneg %p75
        %p246 = pneg %p99
        %p247 = pneg %p96
        %p248 = pneg %p120
        %p249 = pneg %p117
        %p250 = pneg %p141
        %p251 = pneg %p138
        %p252 = pneg %p169
        %p253 = pneg %p166
        %s254 = sand.u32 %s156, 1
        %s255 = scalar_lea.sflag [#allocation4], %s254
        %s256 = sand.u32 %s156, 1
        %s257 = smul.addr %s256, 8
        %s258 = scalar_lea.vmem [#allocation5], %s257
        %s259 = smul.u32 2, %s27
        %s260 = smul.u32 2, %s27
        %v261 = vld [vmem:[%s2] sm:$0xf]
        %v262 = vld [vmem:[%s4] sm:$0xf]
        %v263 = vld [vmem:[%s232] sm:$0xff]
        %v264 = vld [vmem:[%s1] sm:$0xf]
        %266 = vset.pattern.permute.xlu0 0
        %267 = vperm.xlu0 %266, %v264
        %v268 = vpop.permute.xlu0 %267
        %v271 = vlaneseq
        %v272 = vshrl.u32 %v271, 7
        %v273 = vsub.s32 0, %v272
        %v274 = vrot.slane %v263, %v273
        %v275 = vlaneseq
        %v276 = vshrl.u32 %v275, 7
        %v277 = vsub.s32 4, %v276
        %v278 = vrot.slane %v263, %v277
        %v281 = vlaneseq
        %v282 = vshrl.u32 %v281, 7
        %v283 = vsub.s32 0, %v282
        %v284 = vrot.slane %v274, %v283
        %v285 = vlaneseq
        %v286 = vshrl.u32 %v285, 7
        %v287 = vsub.s32 0, %v286
        %v288 = vrot.slane %v278, %v287
        %v289 = vmul.f32 %v268, %v284
        %v290 = vmul.f32 %v268, %v288
        %291 = vset.pattern.permute.xlu0 1
        %292 = vperm.xlu0 %291, %v264
        %v293 = vpop.permute.xlu0 %292
        %v295 = vlaneseq
        %v296 = vshrl.u32 %v295, 7
        %v297 = vsub.s32 1, %v296
        %v298 = vrot.slane %v263, %v297
        %v299 = vlaneseq
        %v300 = vshrl.u32 %v299, 7
        %v301 = vsub.s32 5, %v300
        %v302 = vrot.slane %v263, %v301
        %v305 = vlaneseq
        %v306 = vshrl.u32 %v305, 7
        %v307 = vsub.s32 1, %v306
        %v308 = vrot.slane %v298, %v307
        %v309 = vlaneseq
        %v310 = vshrl.u32 %v309, 7
        %v311 = vsub.s32 1, %v310
        %v312 = vrot.slane %v302, %v311
        %v313 = vmul.f32 %v293, %v308
        %v314 = vmul.f32 %v293, %v312
        %v315 = vadd.f32 %v289, %v313
        %v316 = vadd.f32 %v290, %v314
        %317 = vset.pattern.permute.xlu0 2
        %318 = vperm.xlu0 %317, %v264
        %v319 = vpop.permute.xlu0 %318
        %v321 = vlaneseq
        %v322 = vshrl.u32 %v321, 7
        %v323 = vsub.s32 2, %v322
        %v324 = vrot.slane %v263, %v323
        %v325 = vlaneseq
        %v326 = vshrl.u32 %v325, 7
        %v327 = vsub.s32 6, %v326
        %v328 = vrot.slane %v263, %v327
        %v331 = vlaneseq
        %v332 = vshrl.u32 %v331, 7
        %v333 = vsub.s32 2, %v332
        %v334 = vrot.slane %v324, %v333
        %v335 = vlaneseq
        %v336 = vshrl.u32 %v335, 7
        %v337 = vsub.s32 2, %v336
        %v338 = vrot.slane %v328, %v337
        %v339 = vmul.f32 %v319, %v334
        %v340 = vmul.f32 %v319, %v338
        %v341 = vadd.f32 %v315, %v339
        %v342 = vadd.f32 %v316, %v340
        %343 = vset.pattern.permute.xlu0 3
        %344 = vperm.xlu0 %343, %v264
        %v345 = vpop.permute.xlu0 %344
        %v347 = vlaneseq
        %v348 = vshrl.u32 %v347, 7
        %v349 = vsub.s32 3, %v348
        %v350 = vrot.slane %v263, %v349
        %v351 = vlaneseq
        %v352 = vshrl.u32 %v351, 7
        %v353 = vsub.s32 7, %v352
        %v354 = vrot.slane %v263, %v353
        %v357 = vlaneseq
        %v358 = vshrl.u32 %v357, 7
        %v359 = vsub.s32 3, %v358
        %v360 = vrot.slane %v350, %v359
        %v361 = vlaneseq
        %v362 = vshrl.u32 %v361, 7
        %v363 = vsub.s32 3, %v362
        %v364 = vrot.slane %v354, %v363
        %v365 = vmul.f32 %v345, %v360
        %v366 = vmul.f32 %v345, %v364
        %v367 = vadd.f32 %v341, %v365
        %v368 = vadd.f32 %v342, %v366
        %370 = vset.pattern.permute.xlu0 0
        %371 = vperm.xlu0 %370, %v261
        %v372 = vpop.permute.xlu0 %371
        %v374 = vadd.f32 %v367, %v372
        %v375 = vadd.f32 %v368, %v372
        %v376 = vmul.f32 %v374, 0.5
        %v377 = vmul.f32 %v375, 0.5
        %v378 = vtanh.pop %v376
        %v379 = vtanh.pop %v377
        %v380 = vmul.f32 %v378, 0.5
        %v381 = vmul.f32 %v379, 0.5
        %v382 = vadd.f32 %v380, 0.5
        %v383 = vadd.f32 %v381, 0.5
        %v384 = vmul.f32 %v374, %v382
        %v385 = vmul.f32 %v375, %v383
        %v386 = vld [vmem:[%s3] sm:$0xf]
        %388 = vset.pattern.permute.xlu0 0
        %389 = vperm.xlu0 %388, %v386
        %v390 = vpop.permute.xlu0 %389
        %v392 = vlaneseq
        %v393 = vshrl.u32 %v392, 7
        %v394 = vsub.s32 0, %v393
        %v395 = vrot.slane %v384, %v394
        %v396 = vlaneseq
        %v397 = vshrl.u32 %v396, 7
        %v398 = vsub.s32 0, %v397
        %v399 = vrot.slane %v385, %v398
        %v400 = vmul.f32 %v390, %v395
        %v401 = vmul.f32 %v390, %v399
        %402 = vset.pattern.permute.xlu0 1
        %403 = vperm.xlu0 %402, %v386
        %v404 = vpop.permute.xlu0 %403
        %v406 = vlaneseq
        %v407 = vshrl.u32 %v406, 7
        %v408 = vsub.s32 1, %v407
        %v409 = vrot.slane %v384, %v408
        %v410 = vlaneseq
        %v411 = vshrl.u32 %v410, 7
        %v412 = vsub.s32 1, %v411
        %v413 = vrot.slane %v385, %v412
        %v414 = vmul.f32 %v404, %v409
        %v415 = vmul.f32 %v404, %v413
        %v416 = vadd.f32 %v400, %v414
        %v417 = vadd.f32 %v401, %v415
        %418 = vset.pattern.permute.xlu0 2
        %419 = vperm.xlu0 %418, %v386
        %v420 = vpop.permute.xlu0 %419
        %v422 = vlaneseq
        %v423 = vshrl.u32 %v422, 7
        %v424 = vsub.s32 2, %v423
        %v425 = vrot.slane %v384, %v424
        %v426 = vlaneseq
        %v427 = vshrl.u32 %v426, 7
        %v428 = vsub.s32 2, %v427
        %v429 = vrot.slane %v385, %v428
        %v430 = vmul.f32 %v420, %v425
        %v431 = vmul.f32 %v420, %v429
        %v432 = vadd.f32 %v416, %v430
        %v433 = vadd.f32 %v417, %v431
        %434 = vset.pattern.permute.xlu0 3
        %435 = vperm.xlu0 %434, %v386
        %v436 = vpop.permute.xlu0 %435
        %v438 = vlaneseq
        %v439 = vshrl.u32 %v438, 7
        %v440 = vsub.s32 3, %v439
        %v441 = vrot.slane %v384, %v440
        %v442 = vlaneseq
        %v443 = vshrl.u32 %v442, 7
        %v444 = vsub.s32 3, %v443
        %v445 = vrot.slane %v385, %v444
        %v446 = vmul.f32 %v436, %v441
        %v447 = vmul.f32 %v436, %v445
        %v448 = vadd.f32 %v432, %v446
        %v449 = vadd.f32 %v433, %v447
        %451 = vset.pattern.permute.xlu0 0
        %452 = vperm.xlu0 %451, %v262
        %v453 = vpop.permute.xlu0 %452
        %v455 = vadd.f32 %v448, %v453
        %v456 = vadd.f32 %v449, %v453
        %v457 = vmul.f32 %v455, 0.5
        %v458 = vmul.f32 %v456, 0.5
        %v459 = vtanh.pop %v457
        %v460 = vtanh.pop %v458
        %v461 = vmul.f32 %v459, 0.5
        %v462 = vmul.f32 %v460, 0.5
        %v463 = vadd.f32 %v461, 0.5
        %v464 = vadd.f32 %v462, 0.5
        %v465 = vmul.f32 %v455, %v463
        %v466 = vmul.f32 %v456, %v464
        %v469 = vcombine.low %v465, %v466
        %v471 = vadd.f32 %v263, %v469
        %472 = vst [vmem:[%s258] sm:$0xff] %v471
        %s473 = sand.u32 %s156, 1
        %s474 = scalar_lea.sflag [#allocation4], %s473
        %s475 = sand.u32 %s156, 1
        %s476 = smul.addr %s475, 8
        %s477 = scalar_lea.vmem [#allocation5], %s476
        // Predicated region
        $region45: #{tpu_custom_call.1} parent=39 // pred_check
          %p478 = pneg %p166
        $region46: #{tpu_custom_call.1} parent=39 // pred_check_branch
          %480 = sbr.rel (%p478) target = $region48
        $region47: #{tpu_custom_call.1} parent=39 // pred_region
          %s481 = smul.u32 2, %s27
          %s483 = ssub.s32 128, 128
          %484 = vsyncadd %s474, %s483
          %s485 = smul.addr %s26, 2
          %s486 = sadd.s32 %s481, %s485
          %s487 = smul.addr %s486, 64
          %s488 = scalar_lea.hbm %s5, %s487
          %s490 = sshll.u32 %s477, 4
          %s491 = int_to_ptr.vmem [resolvable:$true] %s490
          %493 = dma.vmem_to_hbm [thread:$0]  %s491, 128, %s488, %s474
        $region48: #{tpu_custom_call.1} parent=39 // pred_fallthru
          _
      $region40: #{tpu_custom_call.1} parent=5 // pred_fallthru
        _
      %p494 = scmp.le.s32.totalorder 2, %s17
      // Predicated region
      $region49: #{tpu_custom_call.1} parent=5 // pred_check
        %p495 = pneg %p494
      $region50: #{tpu_custom_call.1} parent=5 // pred_check_branch
        %497 = sbr.rel (%p495) target = $region52
      $region51: #{tpu_custom_call.1} parent=5 // pred_region
        %s498 = ssub.s32 %s17, 2
        // Predicated region
        $region53: #{tpu_custom_call.1} parent=51 // pred_check
          %p499 = pneg %p172
        $region54: #{tpu_custom_call.1} parent=51 // pred_check_branch
          %501 = sbr.rel (%p499) target = $region56
        $region55: #{tpu_custom_call.1} parent=51 // pred_region
          %s502 = sand.u32 %s157, 1
          %s503 = scalar_lea.sflag [#allocation4], %s502
          %s504 = sand.u32 %s157, 1
          %s505 = smul.addr %s504, 8
          %s506 = scalar_lea.vmem [#allocation5], %s505
          %507 = dma.done %s503, 128
        $region56: #{tpu_custom_call.1} parent=51 // pred_fallthru
          _
      $region52: #{tpu_custom_call.1} parent=5 // pred_fallthru
        _
    $region6: #{tpu_custom_call.1} parent=1 // loop_footer
      %s21 = sadd.s32 1, %s17
    $region7: #{tpu_custom_call.1} parent=1 // loop_footer_branch
      %16 = sbr.rel target = $region3
    $region8: #{tpu_custom_call.1} parent=1 // loop_exit
      _
    %508 = vsyncpa [#allocation3], 1
    %s509 = scalar_lea.sflag [#allocation3], 1
    %510 = vsyncpa %s509, 1
    %511 = vsyncpa [#allocation4], 1
    %s512 = scalar_lea.sflag [#allocation4], 1
    %513 = vsyncpa %s512, 1

</llo_original>
